<compile_context>
chip_gen: v6e
topology: v6e:2x2x1
jax: 0.10.0
libtpu: 0.0.40
codegen_flags: <defaults>
</compile_context>

<pallas_src>
import math

import jax
import jax.numpy as jnp
from jax.experimental import pallas as pl
from jax.experimental.pallas import tpu as pltpu

STD = 0.25
IN_DIM = 256
OUT_DIM = 2
# -0.5*log(2*pi) - log(std): Gaussian log-prob normalization at z == eps.
LOG_NORM = -0.5 * math.log(2.0 * math.pi) - math.log(STD)
MAX_TB = 4096  # rows per batch tile: f32 h tile = 4 MiB (8 MiB double-buffered)


def location_kernel(h_ref, wt_ref, bt_ref, epst_ref, lt_ref):
    # Linear layer on the MXU; accumulate in f32 regardless of input dtype.
    mu = jnp.dot(h_ref[...], wt_ref[...], preferred_element_type=jnp.float32)  # (TB, 2)

    # Transpose the tiny result to the lane-dense (2, TB) layout (XLU vxpose);
    # everything downstream (bias add, sample, tanh, store) runs at full lane
    # occupancy instead of 2/128.
    mu_t = mu.T                                                # (2, TB)

    # Reparameterized draw: sample = mu + std * eps, all in (2, TB) layout.
    sample_t = mu_t + bt_ref[...] + STD * epst_ref[...]        # bias (2,1) lane-bcast

    # Squashed location, stored lane-dense.
    lt_ref[...] = jnp.tanh(sample_t).astype(lt_ref.dtype)


def location_forward(h, weight, bias, eps):
    """h: (B, 256) (f32 or bf16); weight: (2, 256) (PyTorch fc.weight layout);
    bias: (2,); eps: (B, 2) standard-normal draws.
    Returns (logpi, l), each (B, 2) float32 — identical semantics to LOCATION.forward."""
    B = h.shape[0]

    # NOTE: if h arrives in bf16 the weights are cast to bf16 too (MXU-native);
    # accumulation stays f32.  Deliberate perf/accuracy tradeoff.
    wt = weight.T.astype(h.dtype)                              # (256, 2), resident
    bt = bias.reshape(OUT_DIM, 1).astype(jnp.float32)          # (2, 1), resident
    eps = eps.astype(jnp.float32)
    eps_t = eps.T                                              # (2, B), lane-dense

    # logpi depends only on eps (since (sample - mu)/std == eps exactly), so it
    # is computed outside the kernel and fuses with the eps generation.
    logpi = (-0.5 * (eps * eps) + LOG_NORM).astype(jnp.float32)  # (B, 2)

    # Batch tile: whole batch if it fits one 4 MiB-ish tile, else 4096-row
    # (multiple of 8/128) tiles with the ragged tail handled by Pallas.
    TB = B if B <= MAX_TB else MAX_TB
    grid = (pl.cdiv(B, TB),)

    l_t = pl.pallas_call(
        location_kernel,
        out_shape=jax.ShapeDtypeStruct((OUT_DIM, B), jnp.float32),
        grid=grid,
        in_specs=[
            pl.BlockSpec((TB, IN_DIM), lambda i: (i, 0)),        # h tile (streamed)
            pl.BlockSpec((IN_DIM, OUT_DIM), lambda i: (0, 0)),   # W^T (resident)
            pl.BlockSpec((OUT_DIM, 1), lambda i: (0, 0)),        # bias (resident)
            pl.BlockSpec((OUT_DIM, TB), lambda i: (0, i)),       # eps^T tile (lane-dense)
        ],
        out_specs=pl.BlockSpec((OUT_DIM, TB), lambda i: (0, i)),  # l^T (lane-dense)
        compiler_params=pltpu.CompilerParams(
            # Batch axis is embarrassingly parallel; on v7x this allows 2-TC
            # sharding.  TODO(synk): confirm both TCs are busy in an xprof trace
            # on v7x; switch to pltpu.CORE_PARALLEL if not.
            dimension_semantics=("parallel",),
        ),
    )(h, wt, bt, eps_t)

    l = l_t.T                                                  # back to (B, 2)
    return logpi, l


if __name__ == "__main__":
    key = jax.random.PRNGKey(0)
    k_h, k_w, k_b, k_eps = jax.random.split(key, 4)

    B = 8
    h = jax.random.normal(k_h, (B, IN_DIM), dtype=jnp.float32)
    # Deterministic parameter init (same shapes as nn.Linear(256, 2)).
    bound = 1.0 / jnp.sqrt(jnp.float32(IN_DIM))
    weight = jax.random.uniform(
        k_w, (OUT_DIM, IN_DIM), minval=-bound, maxval=bound, dtype=jnp.float32
    )
    bias = jax.random.uniform(
        k_b, (OUT_DIM,), minval=-bound, maxval=bound, dtype=jnp.float32
    )
    # Standard-normal draws feeding the reparameterized Normal sample.
    eps = jax.random.normal(k_eps, (B, OUT_DIM), dtype=jnp.float32)

    logpi, l = location_forward(h, weight, bias, eps)
    jax.block_until_ready((logpi, l))

    # Cross-check against a pure-JAX reference of the same math (PyTorch form).
    mu_ref = h @ weight.T + bias
    sample_ref = mu_ref + STD * eps
    logpi_ref = (
        -0.5 * ((sample_ref - mu_ref) / STD) ** 2
        - jnp.log(STD)
        - 0.5 * jnp.log(2.0 * jnp.pi)
    )
    l_ref = jnp.tanh(sample_ref)
    assert logpi.shape == (B, OUT_DIM) and l.shape == (B, OUT_DIM)
    assert jnp.allclose(logpi, logpi_ref, atol=1e-5, rtol=1e-5)
    assert jnp.allclose(l, l_ref, atol=1e-5, rtol=1e-5)

    print("KERNEL_OK")
</pallas_src>

<mosaic_0001>
module attributes {stable_mosaic.version = 11 : i64} {
  func.func @location_kernel(%arg0: i32, %arg1: memref<8x256xf32, #tpu.memory_space<vmem>>, %arg2: memref<256x2xf32, #tpu.memory_space<vmem>>, %arg3: memref<2x1xf32, #tpu.memory_space<vmem>>, %arg4: memref<2x8xf32, #tpu.memory_space<vmem>>, %arg5: memref<2x8xf32, #tpu.memory_space<vmem>>) attributes {dimension_semantics = [#tpu.dimension_semantics<parallel>], iteration_bounds = array<i64: 1>, scalar_prefetch = 0 : i64, scratch_operands = 0 : i64, tpu.core_type = #tpu.core_type<tc>, window_params = [{transform_indices = @transform_0, window_bounds = array<i64: 8, 256>}, {pipeline_mode = #tpu.pipeline_mode<synchronous>, transform_indices = @transform_1, window_bounds = array<i64: 256, 2>}, {pipeline_mode = #tpu.pipeline_mode<synchronous>, transform_indices = @transform_2, window_bounds = array<i64: 2, 1>}, {transform_indices = @transform_3, window_bounds = array<i64: 2, 8>}, {transform_indices = @transform_4, window_bounds = array<i64: 2, 8>}]} {
    %c0 = arith.constant 0 : index
    %c0_0 = arith.constant 0 : index
    %0 = vector.load %arg1[%c0, %c0_0] : memref<8x256xf32, #tpu.memory_space<vmem>>, vector<8x256xf32>
    %c0_1 = arith.constant 0 : index
    %c0_2 = arith.constant 0 : index
    %1 = vector.load %arg2[%c0_1, %c0_2] : memref<256x2xf32, #tpu.memory_space<vmem>>, vector<256x2xf32>
    %cst = arith.constant dense<0.000000e+00> : vector<8x2xf32>
    %2 = tpu.matmul %0, %1, %cst {dimension_numbers = #tpu.dot_dimension_numbers<[1], [0], [0], [1], [0, 0, 1, 1], [], []>} : vector<8x256xf32>, vector<256x2xf32>, vector<8x2xf32> -> vector<8x2xf32>
    %3 = tpu.transpose %2, [1, 0] : vector<8x2xf32> -> vector<2x8xf32>
    %c0_3 = arith.constant 0 : index
    %c0_4 = arith.constant 0 : index
    %4 = vector.load %arg3[%c0_3, %c0_4] : memref<2x1xf32, #tpu.memory_space<vmem>>, vector<2x1xf32>
    %5 = vector.broadcast %4 : vector<2x1xf32> to vector<2x8xf32>
    %6 = arith.addf %3, %5 : vector<2x8xf32>
    %c0_5 = arith.constant 0 : index
    %c0_6 = arith.constant 0 : index
    %7 = vector.load %arg4[%c0_5, %c0_6] : memref<2x8xf32, #tpu.memory_space<vmem>>, vector<2x8xf32>
    %cst_7 = arith.constant 2.500000e-01 : f32
    %8 = vector.broadcast %cst_7 : f32 to vector<2x8xf32>
    %9 = arith.mulf %8, %7 : vector<2x8xf32>
    %10 = arith.addf %6, %9 : vector<2x8xf32>
    %11 = math.tanh %10 : vector<2x8xf32>
    %c0_8 = arith.constant 0 : index
    %c0_9 = arith.constant 0 : index
    %12 = vector.load %arg5[%c0_8, %c0_9] : memref<2x8xf32, #tpu.memory_space<vmem>>, vector<2x8xf32>
    tpu.vector_store %arg5[%c0_8, %c0_9], %11 {strides = array<i32>} : memref<2x8xf32, #tpu.memory_space<vmem>>, vector<2x8xf32>,
    return
  }
  func.func @transform_0(%arg0: i32) -> (i32, i32) {
    %c0_i32 = arith.constant 0 : i32
    %c0_i32_0 = arith.constant 0 : i32
    return %arg0, %c0_i32 : i32, i32
  }
  func.func @transform_1(%arg0: i32) -> (i32, i32) {
    %c0_i32 = arith.constant 0 : i32
    %c0_i32_0 = arith.constant 0 : i32
    %c0_i32_1 = arith.constant 0 : i32
    return %c0_i32, %c0_i32_0 : i32, i32
  }
  func.func @transform_2(%arg0: i32) -> (i32, i32) {
    %c0_i32 = arith.constant 0 : i32
    %c0_i32_0 = arith.constant 0 : i32
    %c0_i32_1 = arith.constant 0 : i32
    return %c0_i32, %c0_i32_0 : i32, i32
  }
  func.func @transform_3(%arg0: i32) -> (i32, i32) {
    %c0_i32 = arith.constant 0 : i32
    %c0_i32_0 = arith.constant 0 : i32
    return %c0_i32, %arg0 : i32, i32
  }
  func.func @transform_4(%arg0: i32) -> (i32, i32) {
    %c0_i32 = arith.constant 0 : i32
    %c0_i32_0 = arith.constant 0 : i32
    return %c0_i32, %arg0 : i32, i32
  }
}

</mosaic_0001>

<llo_original>
// kernel: tpu_custom_call.1
$region0: #{tpu_custom_call.1}
  #allocation0 [shape = 'u32[]', space=smem, size = 0x4, offset = 0x4, fixed_abs, tag = 'smem constant byte address 0x4 - core index']
  #allocation1 [shape = 'u32[144,128]{1,0:T(1,128)}', space=vmem, size = 0x12000, scoped, tag = 'internal scratch']
  %s0 = inlined_call_operand.vmem [shape: f32[8,256], index: 0, kind: input, shape index: {}]
  %s1 = inlined_call_operand.vmem [shape: f32[256,2], index: 1, kind: input, shape index: {}]
  %s2 = inlined_call_operand.vmem [shape: f32[2,1], index: 2, kind: input, shape index: {}]
  %s3 = inlined_call_operand.vmem [shape: f32[2,8], index: 3, kind: input, shape index: {}]
  %s4 = inlined_call_operand.hbm [shape: f32[2,8], index: 4, kind: output, shape index: {}]
  %s5 = sld [smem:[#allocation0]]
  $region26: #{tpu_custom_call.1} parent=0
    _
  %s7 = ssub.s32 1, %s5
  %s8 = scalar_select 0, %s7, %s5
  $region1: #{tpu_custom_call.1} parent=0
    #allocation2 [shape = 'u8[1024]{0}', space=vmem, size = 0x400, scoped, tag = 'output window, operand 0, single buffered']
    #allocation3 [shape = 's32[1]{0}', space=sflag, size = 0x4, scoped, tag = 'scoped memory for tpu_custom_call.1']
    %9 = vsyncpa [#allocation3], 0
    // Predicated region
    $region2: #{tpu_custom_call.1} parent=1 // pred_check
      _
    $region3: #{tpu_custom_call.1} parent=1 // pred_check_branch
      %11 = sbr.rel (0) target = $region5
    $region4: #{tpu_custom_call.1} parent=1 // pred_region
      _
    $region5: #{tpu_custom_call.1} parent=1 // pred_fallthru
      _
    // Predicated region
    $region6: #{tpu_custom_call.1} parent=1 // pred_check
      _
    $region7: #{tpu_custom_call.1} parent=1 // pred_check_branch
      %13 = sbr.rel (0) target = $region9
    $region8: #{tpu_custom_call.1} parent=1 // pred_region
      _
    $region9: #{tpu_custom_call.1} parent=1 // pred_fallthru
      _
    // Predicated region
    $region10: #{tpu_custom_call.1} parent=1 // pred_check
      _
    $region11: #{tpu_custom_call.1} parent=1 // pred_check_branch
      %15 = sbr.rel (0) target = $region13
    $region12: #{tpu_custom_call.1} parent=1 // pred_region
      _
    $region13: #{tpu_custom_call.1} parent=1 // pred_fallthru
      _
    // Predicated region
    $region14: #{tpu_custom_call.1} parent=1 // pred_check
      _
    $region15: #{tpu_custom_call.1} parent=1 // pred_check_branch
      %17 = sbr.rel (0) target = $region17
    $region16: #{tpu_custom_call.1} parent=1 // pred_region
      _
    $region17: #{tpu_custom_call.1} parent=1 // pred_fallthru
      _
    %v18 = vld [vmem:[%s0] sm:$0xff]
    %v19 = vld [vmem:[%s0 + $0x8] sm:$0xff]
    %v20 = vld [vmem:[%s1] sm:$0xff]
    %v21 = vld [vmem:[%s1 + $0x8] sm:$0xff]
    %v22 = vld [vmem:[%s1 + $0x10] sm:$0xff]
    %v23 = vld [vmem:[%s1 + $0x18] sm:$0xff]
    %v24 = vld [vmem:[%s1 + $0x20] sm:$0xff]
    %v25 = vld [vmem:[%s1 + $0x28] sm:$0xff]
    %v26 = vld [vmem:[%s1 + $0x30] sm:$0xff]
    %v27 = vld [vmem:[%s1 + $0x38] sm:$0xff]
    %v28 = vld [vmem:[%s1 + $0x40] sm:$0xff]
    %v29 = vld [vmem:[%s1 + $0x48] sm:$0xff]
    %v30 = vld [vmem:[%s1 + $0x50] sm:$0xff]
    %v31 = vld [vmem:[%s1 + $0x58] sm:$0xff]
    %v32 = vld [vmem:[%s1 + $0x60] sm:$0xff]
    %v33 = vld [vmem:[%s1 + $0x68] sm:$0xff]
    %v34 = vld [vmem:[%s1 + $0x70] sm:$0xff]
    %v35 = vld [vmem:[%s1 + $0x78] sm:$0xff]
    %v36 = vld [vmem:[%s1 + $0x80] sm:$0xff]
    %v37 = vld [vmem:[%s1 + $0x88] sm:$0xff]
    %v38 = vld [vmem:[%s1 + $0x90] sm:$0xff]
    %v39 = vld [vmem:[%s1 + $0x98] sm:$0xff]
    %v40 = vld [vmem:[%s1 + $0xa0] sm:$0xff]
    %v41 = vld [vmem:[%s1 + $0xa8] sm:$0xff]
    %v42 = vld [vmem:[%s1 + $0xb0] sm:$0xff]
    %v43 = vld [vmem:[%s1 + $0xb8] sm:$0xff]
    %v44 = vld [vmem:[%s1 + $0xc0] sm:$0xff]
    %v45 = vld [vmem:[%s1 + $0xc8] sm:$0xff]
    %v46 = vld [vmem:[%s1 + $0xd0] sm:$0xff]
    %v47 = vld [vmem:[%s1 + $0xd8] sm:$0xff]
    %v48 = vld [vmem:[%s1 + $0xe0] sm:$0xff]
    %v49 = vld [vmem:[%s1 + $0xe8] sm:$0xff]
    %v50 = vld [vmem:[%s1 + $0xf0] sm:$0xff]
    %v51 = vld [vmem:[%s1 + $0xf8] sm:$0xff]
    %52 = vmatprep.subr.mxu0 0.0
    %53 = vmatpush1.msra.mxu0 %v35
    %54 = vmatprep.subr.mxu0 0.0
    %55 = vmatpush1.msra.mxu0 %v34
    %56 = vmatprep.subr.mxu0 0.0
    %57 = vmatpush1.msra.mxu0 %v33
    %58 = vmatprep.subr.mxu0 0.0
    %59 = vmatpush1.msra.mxu0 %v32
    %60 = vmatprep.subr.mxu0 0.0
    %61 = vmatpush1.msra.mxu0 %v31
    %62 = vmatprep.subr.mxu0 0.0
    %63 = vmatpush1.msra.mxu0 %v30
    %64 = vmatprep.subr.mxu0 0.0
    %65 = vmatpush1.msra.mxu0 %v29
    %66 = vmatprep.subr.mxu0 0.0
    %67 = vmatpush1.msra.mxu0 %v28
    %68 = vmatprep.subr.mxu0 0.0
    %69 = vmatpush1.msra.mxu0 %v27
    %70 = vmatprep.subr.mxu0 0.0
    %71 = vmatpush1.msra.mxu0 %v26
    %72 = vmatprep.subr.mxu0 0.0
    %73 = vmatpush1.msra.mxu0 %v25
    %74 = vmatprep.subr.mxu0 0.0
    %75 = vmatpush1.msra.mxu0 %v24
    %76 = vmatprep.subr.mxu0 0.0
    %77 = vmatpush1.msra.mxu0 %v23
    %78 = vmatprep.subr.mxu0 0.0
    %79 = vmatpush1.msra.mxu0 %v22
    %80 = vmatprep.subr.mxu0 0.0
    %81 = vmatpush1.msra.mxu0 %v21
    %82 = vmatprep.subr.mxu0 0.0
    %83 = vmatpush1.msra.mxu0 %v20
    %84 = vmatprep.subr.mxu0 0.0
    %85 = vmatpush2.msra.mxu0 %v51
    %86 = vmatprep.subr.mxu0 0.0
    %87 = vmatpush2.msra.mxu0 %v50
    %88 = vmatprep.subr.mxu0 0.0
    %89 = vmatpush2.msra.mxu0 %v49
    %90 = vmatprep.subr.mxu0 0.0
    %91 = vmatpush2.msra.mxu0 %v48
    %92 = vmatprep.subr.mxu0 0.0
    %93 = vmatpush2.msra.mxu0 %v47
    %94 = vmatprep.subr.mxu0 0.0
    %95 = vmatpush2.msra.mxu0 %v46
    %96 = vmatprep.subr.mxu0 0.0
    %97 = vmatpush2.msra.mxu0 %v45
    %98 = vmatprep.subr.mxu0 0.0
    %99 = vmatpush2.msra.mxu0 %v44
    %100 = vmatprep.subr.mxu0 0.0
    %101 = vmatpush2.msra.mxu0 %v43
    %102 = vmatprep.subr.mxu0 0.0
    %103 = vmatpush2.msra.mxu0 %v42
    %104 = vmatprep.subr.mxu0 0.0
    %105 = vmatpush2.msra.mxu0 %v41
    %106 = vmatprep.subr.mxu0 0.0
    %107 = vmatpush2.msra.mxu0 %v40
    %108 = vmatprep.subr.mxu0 0.0
    %109 = vmatpush2.msra.mxu0 %v39
    %110 = vmatprep.subr.mxu0 0.0
    %111 = vmatpush2.msra.mxu0 %v38
    %112 = vmatprep.subr.mxu0 0.0
    %113 = vmatpush2.msra.mxu0 %v37
    %114 = vmatprep.subr.mxu0 0.0
    %115 = vmatpush2.msra.mxu0 %v36
    %116 = vmatprep.mubr.f32.mxu0 %v19
    %117 = vmatmul.mubr.f32.gmra.mxu0 %v18
    %v118 = vpop.f32.mrf.mxu0
    %v119 = vadd.f32 0.0, %v118
    %v120 = vpop.f32.mrf.mxu0
    %121 = vdwg.mxu0
    %122 = vxpose.xlu0.b32.start [1/16] %v119, 128
    %123 = vxpose.xlu0.b32.cont [2/16] 0.0, 128
    %124 = vxpose.xlu0.b32.cont [3/16] 0.0, 128
    %125 = vxpose.xlu0.b32.cont [4/16] 0.0, 128
    %126 = vxpose.xlu0.b32.cont [5/16] 0.0, 128
    %127 = vxpose.xlu0.b32.cont [6/16] 0.0, 128
    %128 = vxpose.xlu0.b32.cont [7/16] 0.0, 128
    %129 = vxpose.xlu0.b32.cont [8/16] 0.0, 128
    %130 = vxpose.xlu0.b32.cont [9/16] 0.0, 128
    %131 = vxpose.xlu0.b32.cont [10/16] 0.0, 128
    %132 = vxpose.xlu0.b32.cont [11/16] 0.0, 128
    %133 = vxpose.xlu0.b32.cont [12/16] 0.0, 128
    %134 = vxpose.xlu0.b32.cont [13/16] 0.0, 128
    %135 = vxpose.xlu0.b32.cont [14/16] 0.0, 128
    %136 = vxpose.xlu0.b32.cont [15/16] 0.0, 128
    %137 = vxpose.xlu0.b32.end [16/16] 0.0, 128
    %v138 = vpop.trf.xlu0
    %v139 = vpop.trf.xlu0
    %v140 = vpop.trf.xlu0
    %v141 = vpop.trf.xlu0
    %v142 = vpop.trf.xlu0
    %v143 = vpop.trf.xlu0
    %v144 = vpop.trf.xlu0
    %v145 = vpop.trf.xlu0
    %v146 = vpop.trf.xlu0
    %v147 = vpop.trf.xlu0
    %v148 = vpop.trf.xlu0
    %v149 = vpop.trf.xlu0
    %v150 = vpop.trf.xlu0
    %v151 = vpop.trf.xlu0
    %v152 = vpop.trf.xlu0
    %v153 = vpop.trf.xlu0
    %v154 = vld [vmem:[%s2] sm:$0x3]
    %156 = vset.pattern.permute.xlu0 0
    %157 = vperm.xlu0 %156, %v154
    %v158 = vpop.permute.xlu0 %157
    %v160 = vadd.f32 %v138, %v158
    %v161 = vld [vmem:[%s3] sm:$0x3]
    %v162 = vmul.f32 %v161, 0.25
    %v163 = vadd.f32 %v160, %v162
    %v164 = vtanh.pop %v163
    %vm165 = vcmask 58368
    %166 = vst.msk [vmem:[#allocation2] sm:$0x3] %vm165, %v164
    // Predicated region
    $region18: #{tpu_custom_call.1} parent=1 // pred_check
      _
    $region19: #{tpu_custom_call.1} parent=1 // pred_check_branch
      %168 = sbr.rel (0) target = $region21
    $region20: #{tpu_custom_call.1} parent=1 // pred_region
      %s170 = ssub.s32 32, 32
      %171 = vsyncadd [#allocation3], %s170
      %s173 = sshll.u32 [#allocation2], 4
      %s174 = int_to_ptr.vmem [resolvable:$true] %s173
      %176 = dma.vmem_to_hbm [thread:$0]  %s174, 32, %s4, [#allocation3]
    $region21: #{tpu_custom_call.1} parent=1 // pred_fallthru
      _
    // Predicated region
    $region22: #{tpu_custom_call.1} parent=1 // pred_check
      _
    $region23: #{tpu_custom_call.1} parent=1 // pred_check_branch
      %178 = sbr.rel (0) target = $region25
    $region24: #{tpu_custom_call.1} parent=1 // pred_region
      %179 = dma.done [#allocation3], 32
    $region25: #{tpu_custom_call.1} parent=1 // pred_fallthru
      _
    %180 = vsyncpa [#allocation3], 1

</llo_original>
